<compile_context>
chip_gen: v7x
topology: tpu7x:2x2x1
jax: 0.10.0
libtpu: 0.0.40
codegen_flags: <defaults>
</compile_context>

<pallas_src>
import jax
import jax.numpy as jnp
from jax.experimental import pallas as pl
from jax.experimental.pallas import tpu as pltpu

EPS = 1e-5
P = 128  # lane-dense padded width for every feature axis


def _mlp_decoder_kernel(x_ref, w_ref, v_ref, o_ref):
    # x_ref: (N, P) f32   w_ref: (4, P, P) bf16   v_ref: (10, P) f32
    # v rows: [b1, g1, be1, b2, g2, be2, b3, g3, be3, b4]
    v = v_ref[...]  # (10, P) f32, tiny

    def row(i):  # static slice -> (1, P) f32
        return v[i:i + 1, :]

    def linear(h_f32, li):
        # bf16 operands into the MXU, f32 accumulation.
        return jnp.dot(h_f32.astype(jnp.bfloat16), w_ref[li],
                       preferred_element_type=jnp.float32)

    def relu_bn(z, g, be):
        h = jnp.maximum(z, 0.0)
        # Training-mode BN, folded: one-pass biased variance, single scale/shift.
        mu = jnp.mean(h, axis=0, keepdims=True)                    # (1, P)
        var = jnp.mean(h * h, axis=0, keepdims=True) - mu * mu     # (1, P), f32
        scale = jax.lax.rsqrt(var + EPS) * g                       # (1, P)
        shift = be - mu * scale                                    # (1, P)
        return h * scale + shift                                   # 1 mul + 1 add / elem

    h = x_ref[...]                                                 # (N, P) f32
    h = relu_bn(linear(h, 0) + row(0), row(1), row(2))
    h = relu_bn(linear(h, 1) + row(3), row(4), row(5))
    h = relu_bn(linear(h, 2) + row(6), row(7), row(8))
    o_ref[...] = linear(h, 3) + row(9)                             # lane-dense store


def mlp_decoder_forward(x, w_stack, v_stack, binary):
    """x: (N, in_dim) f32.  w_stack: (4,P,P) bf16.  v_stack: (10,P) f32."""
    n, in_dim = x.shape
    xp = jnp.zeros((n, P), x.dtype).at[:, :in_dim].set(x)   # lane-pad input

    vmem = pl.BlockSpec(memory_space=pltpu.MemorySpace.VMEM)
    out = pl.pallas_call(
        _mlp_decoder_kernel,
        out_shape=jax.ShapeDtypeStruct((n, P), jnp.float32),
        in_specs=[vmem, vmem, vmem],
        out_specs=vmem,
    )(xp, w_stack, v_stack)
    return out[:, :binary]


def init_params(key, in_dim, hidden_dim, out_dim, binary=1):
    """Unpadded f32 parameters. Linear weights stored transposed (in, out);
    biases / gamma / beta stored (1, F)."""
    keys = jax.random.split(key, 16)

    def lin(kw, kb, fin, fout):
        bound = 1.0 / jnp.sqrt(fin)
        w = jax.random.uniform(kw, (fin, fout), jnp.float32, -bound, bound)
        b = jax.random.uniform(kb, (1, fout), jnp.float32, -bound, bound)
        return w, b

    w1, b1 = lin(keys[0], keys[1], in_dim, hidden_dim)
    w2, b2 = lin(keys[2], keys[3], hidden_dim, hidden_dim)
    w3, b3 = lin(keys[4], keys[5], hidden_dim, out_dim)
    w4, b4 = lin(keys[6], keys[7], out_dim, binary)

    def bn(kg, kb, f):
        g = 1.0 + 0.1 * jax.random.normal(kg, (1, f), jnp.float32)
        be = 0.1 * jax.random.normal(kb, (1, f), jnp.float32)
        return g, be

    g1, be1 = bn(keys[8], keys[9], hidden_dim)
    g2, be2 = bn(keys[10], keys[11], hidden_dim)
    g3, be3 = bn(keys[12], keys[13], out_dim)

    return dict(
        w1=w1, b1=b1, g1=g1, be1=be1,
        w2=w2, b2=b2, g2=g2, be2=be2,
        w3=w3, b3=b3, g3=g3, be3=be3,
        w4=w4, b4=b4,
    )


def pack_params(p, in_dim, hidden_dim, out_dim, binary):
    """Zero-pad every feature axis to P=128 and consolidate into two slabs:
    (4, P, P) bf16 weights and (10, P) f32 bias/gamma/beta rows."""
    def pad_mat(w, r, c):
        return jnp.zeros((P, P), jnp.float32).at[:r, :c].set(w)

    w_stack = jnp.stack([
        pad_mat(p["w1"], in_dim, hidden_dim),
        pad_mat(p["w2"], hidden_dim, hidden_dim),
        pad_mat(p["w3"], hidden_dim, out_dim),
        pad_mat(p["w4"], out_dim, binary),
    ]).astype(jnp.bfloat16)                                   # (4, P, P)

    def pad_vec(v):  # v: (1, f) -> (P,), zero-padded (gamma pad must be 0)
        return jnp.zeros((P,), jnp.float32).at[: v.shape[-1]].set(v[0])

    v_stack = jnp.stack([
        pad_vec(p["b1"]), pad_vec(p["g1"]), pad_vec(p["be1"]),
        pad_vec(p["b2"]), pad_vec(p["g2"]), pad_vec(p["be2"]),
        pad_vec(p["b3"]), pad_vec(p["g3"]), pad_vec(p["be3"]),
        pad_vec(p["b4"]),
    ])                                                        # (10, P) f32
    return w_stack, v_stack


def _reference_forward(x, p):
    """Pure-JAX reference mirroring the kernel's mixed precision:
    bf16 matmul operands, f32 accumulation, f32 train-mode BatchNorm."""
    def mm(h, w):
        return jnp.dot(h.astype(jnp.bfloat16), w.astype(jnp.bfloat16),
                       preferred_element_type=jnp.float32)

    def bn(h, g, be):
        mu = jnp.mean(h, axis=0, keepdims=True)
        var = jnp.mean((h - mu) ** 2, axis=0, keepdims=True)
        return (h - mu) / jnp.sqrt(var + EPS) * g + be

    h = bn(jax.nn.relu(mm(x, p["w1"]) + p["b1"]), p["g1"], p["be1"])
    h = bn(jax.nn.relu(mm(h, p["w2"]) + p["b2"]), p["g2"], p["be2"])
    h = bn(jax.nn.relu(mm(h, p["w3"]) + p["b3"]), p["g3"], p["be3"])
    return mm(h, p["w4"]) + p["b4"]


if __name__ == "__main__":
    in_dim, hidden_dim, out_dim, binary = 32, 32, 16, 1
    batch = 8

    key = jax.random.PRNGKey(0)
    k_x, k_p = jax.random.split(key)
    x = jax.random.normal(k_x, (batch, in_dim), jnp.float32)
    params = init_params(k_p, in_dim, hidden_dim, out_dim, binary)
    w_stack, v_stack = pack_params(params, in_dim, hidden_dim, out_dim, binary)

    out = mlp_decoder_forward(x, w_stack, v_stack, binary)
    out = jax.block_until_ready(out)

    ref = _reference_forward(x, params)
    assert out.shape == (batch, binary)
    # Tolerance sized for bf16 MXU operands (both kernel and reference use bf16
    # weights/activations with f32 accumulation; BN stats are f32 in both).
    assert jnp.allclose(out, ref, atol=1e-2, rtol=1e-2), "mismatch vs reference"

    print("KERNEL_OK")
</pallas_src>

<mosaic_0001>
module attributes {stable_mosaic.version = 11 : i64} {
  func.func @_mlp_decoder_kernel(%arg0: memref<8x128xf32, #tpu.memory_space<vmem>>, %arg1: memref<4x128x128xbf16, #tpu.memory_space<vmem>>, %arg2: memref<10x128xf32, #tpu.memory_space<vmem>>, %arg3: memref<8x128xf32, #tpu.memory_space<vmem>>) attributes {dimension_semantics = [], scalar_prefetch = 0 : i64, scratch_operands = 0 : i64, tpu.core_type = #tpu.core_type<tc>} {
    %c0 = arith.constant 0 : index
    %c0_0 = arith.constant 0 : index
    %0 = vector.load %arg2[%c0, %c0_0] : memref<10x128xf32, #tpu.memory_space<vmem>>, vector<10x128xf32>
    %c0_1 = arith.constant 0 : index
    %c0_2 = arith.constant 0 : index
    %1 = vector.load %arg0[%c0_1, %c0_2] : memref<8x128xf32, #tpu.memory_space<vmem>>, vector<8x128xf32>
    %2 = arith.truncf %1 : vector<8x128xf32> to vector<8x128xbf16>
    %c0_3 = arith.constant 0 : index
    %c0_4 = arith.constant 0 : index
    %c0_5 = arith.constant 0 : index
    %3 = vector.load %arg1[%c0_3, %c0_4, %c0_5] : memref<4x128x128xbf16, #tpu.memory_space<vmem>>, vector<1x128x128xbf16>
    %4 = vector.shape_cast %3 : vector<1x128x128xbf16> to vector<128x128xbf16>
    %cst = arith.constant dense<0.000000e+00> : vector<8x128xf32>
    %5 = tpu.matmul %2, %4, %cst {dimension_numbers = #tpu.dot_dimension_numbers<[1], [0], [0], [1], [0, 0, 1, 1], [], []>} : vector<8x128xbf16>, vector<128x128xbf16>, vector<8x128xf32> -> vector<8x128xf32>
    %6 = vector.extract_strided_slice %0 {offsets = [0, 0], sizes = [1, 128], strides = [1, 1]} : vector<10x128xf32> to vector<1x128xf32>
    %7 = vector.broadcast %6 : vector<1x128xf32> to vector<8x128xf32>
    %8 = arith.addf %5, %7 : vector<8x128xf32>
    %9 = vector.extract_strided_slice %0 {offsets = [1, 0], sizes = [1, 128], strides = [1, 1]} : vector<10x128xf32> to vector<1x128xf32>
    %10 = vector.extract_strided_slice %0 {offsets = [2, 0], sizes = [1, 128], strides = [1, 1]} : vector<10x128xf32> to vector<1x128xf32>
    %cst_6 = arith.constant 0.000000e+00 : f32
    %11 = vector.broadcast %cst_6 : f32 to vector<8x128xf32>
    %12 = arith.maximumf %8, %11 : vector<8x128xf32>
    %cst_7 = arith.constant dense<0.000000e+00> : vector<128xf32>
    %13 = vector.multi_reduction <add>, %12, %cst_7 [0] : vector<8x128xf32> to vector<128xf32>
    %14 = vector.shape_cast %13 : vector<128xf32> to vector<1x128xf32>
    %cst_8 = arith.constant 8.000000e+00 : f32
    %15 = vector.broadcast %cst_8 : f32 to vector<1x128xf32>
    %16 = arith.divf %14, %15 : vector<1x128xf32>
    %17 = arith.mulf %12, %12 : vector<8x128xf32>
    %cst_9 = arith.constant dense<0.000000e+00> : vector<128xf32>
    %18 = vector.multi_reduction <add>, %17, %cst_9 [0] : vector<8x128xf32> to vector<128xf32>
    %19 = vector.shape_cast %18 : vector<128xf32> to vector<1x128xf32>
    %cst_10 = arith.constant 8.000000e+00 : f32
    %20 = vector.broadcast %cst_10 : f32 to vector<1x128xf32>
    %21 = arith.divf %19, %20 : vector<1x128xf32>
    %22 = arith.mulf %16, %16 : vector<1x128xf32>
    %23 = arith.subf %21, %22 : vector<1x128xf32>
    %cst_11 = arith.constant 9.99999974E-6 : f32
    %24 = vector.broadcast %cst_11 : f32 to vector<1x128xf32>
    %25 = arith.addf %23, %24 : vector<1x128xf32>
    %26 = math.rsqrt %25 : vector<1x128xf32>
    %27 = arith.mulf %26, %9 : vector<1x128xf32>
    %28 = arith.mulf %16, %27 : vector<1x128xf32>
    %29 = arith.subf %10, %28 : vector<1x128xf32>
    %30 = vector.broadcast %27 : vector<1x128xf32> to vector<8x128xf32>
    %31 = arith.mulf %12, %30 : vector<8x128xf32>
    %32 = vector.broadcast %29 : vector<1x128xf32> to vector<8x128xf32>
    %33 = arith.addf %31, %32 : vector<8x128xf32>
    %34 = arith.truncf %33 : vector<8x128xf32> to vector<8x128xbf16>
    %c1 = arith.constant 1 : index
    %c0_12 = arith.constant 0 : index
    %c0_13 = arith.constant 0 : index
    %35 = vector.load %arg1[%c1, %c0_12, %c0_13] : memref<4x128x128xbf16, #tpu.memory_space<vmem>>, vector<1x128x128xbf16>
    %36 = vector.shape_cast %35 : vector<1x128x128xbf16> to vector<128x128xbf16>
    %cst_14 = arith.constant dense<0.000000e+00> : vector<8x128xf32>
    %37 = tpu.matmul %34, %36, %cst_14 {dimension_numbers = #tpu.dot_dimension_numbers<[1], [0], [0], [1], [0, 0, 1, 1], [], []>} : vector<8x128xbf16>, vector<128x128xbf16>, vector<8x128xf32> -> vector<8x128xf32>
    %38 = vector.extract_strided_slice %0 {offsets = [3, 0], sizes = [1, 128], strides = [1, 1]} : vector<10x128xf32> to vector<1x128xf32>
    %39 = vector.broadcast %38 : vector<1x128xf32> to vector<8x128xf32>
    %40 = arith.addf %37, %39 : vector<8x128xf32>
    %41 = vector.extract_strided_slice %0 {offsets = [4, 0], sizes = [1, 128], strides = [1, 1]} : vector<10x128xf32> to vector<1x128xf32>
    %42 = vector.extract_strided_slice %0 {offsets = [5, 0], sizes = [1, 128], strides = [1, 1]} : vector<10x128xf32> to vector<1x128xf32>
    %cst_15 = arith.constant 0.000000e+00 : f32
    %43 = vector.broadcast %cst_15 : f32 to vector<8x128xf32>
    %44 = arith.maximumf %40, %43 : vector<8x128xf32>
    %cst_16 = arith.constant dense<0.000000e+00> : vector<128xf32>
    %45 = vector.multi_reduction <add>, %44, %cst_16 [0] : vector<8x128xf32> to vector<128xf32>
    %46 = vector.shape_cast %45 : vector<128xf32> to vector<1x128xf32>
    %cst_17 = arith.constant 8.000000e+00 : f32
    %47 = vector.broadcast %cst_17 : f32 to vector<1x128xf32>
    %48 = arith.divf %46, %47 : vector<1x128xf32>
    %49 = arith.mulf %44, %44 : vector<8x128xf32>
    %cst_18 = arith.constant dense<0.000000e+00> : vector<128xf32>
    %50 = vector.multi_reduction <add>, %49, %cst_18 [0] : vector<8x128xf32> to vector<128xf32>
    %51 = vector.shape_cast %50 : vector<128xf32> to vector<1x128xf32>
    %cst_19 = arith.constant 8.000000e+00 : f32
    %52 = vector.broadcast %cst_19 : f32 to vector<1x128xf32>
    %53 = arith.divf %51, %52 : vector<1x128xf32>
    %54 = arith.mulf %48, %48 : vector<1x128xf32>
    %55 = arith.subf %53, %54 : vector<1x128xf32>
    %cst_20 = arith.constant 9.99999974E-6 : f32
    %56 = vector.broadcast %cst_20 : f32 to vector<1x128xf32>
    %57 = arith.addf %55, %56 : vector<1x128xf32>
    %58 = math.rsqrt %57 : vector<1x128xf32>
    %59 = arith.mulf %58, %41 : vector<1x128xf32>
    %60 = arith.mulf %48, %59 : vector<1x128xf32>
    %61 = arith.subf %42, %60 : vector<1x128xf32>
    %62 = vector.broadcast %59 : vector<1x128xf32> to vector<8x128xf32>
    %63 = arith.mulf %44, %62 : vector<8x128xf32>
    %64 = vector.broadcast %61 : vector<1x128xf32> to vector<8x128xf32>
    %65 = arith.addf %63, %64 : vector<8x128xf32>
    %66 = arith.truncf %65 : vector<8x128xf32> to vector<8x128xbf16>
    %c2 = arith.constant 2 : index
    %c0_21 = arith.constant 0 : index
    %c0_22 = arith.constant 0 : index
    %67 = vector.load %arg1[%c2, %c0_21, %c0_22] : memref<4x128x128xbf16, #tpu.memory_space<vmem>>, vector<1x128x128xbf16>
    %68 = vector.shape_cast %67 : vector<1x128x128xbf16> to vector<128x128xbf16>
    %cst_23 = arith.constant dense<0.000000e+00> : vector<8x128xf32>
    %69 = tpu.matmul %66, %68, %cst_23 {dimension_numbers = #tpu.dot_dimension_numbers<[1], [0], [0], [1], [0, 0, 1, 1], [], []>} : vector<8x128xbf16>, vector<128x128xbf16>, vector<8x128xf32> -> vector<8x128xf32>
    %70 = vector.extract_strided_slice %0 {offsets = [6, 0], sizes = [1, 128], strides = [1, 1]} : vector<10x128xf32> to vector<1x128xf32>
    %71 = vector.broadcast %70 : vector<1x128xf32> to vector<8x128xf32>
    %72 = arith.addf %69, %71 : vector<8x128xf32>
    %73 = vector.extract_strided_slice %0 {offsets = [7, 0], sizes = [1, 128], strides = [1, 1]} : vector<10x128xf32> to vector<1x128xf32>
    %74 = vector.extract_strided_slice %0 {offsets = [8, 0], sizes = [1, 128], strides = [1, 1]} : vector<10x128xf32> to vector<1x128xf32>
    %cst_24 = arith.constant 0.000000e+00 : f32
    %75 = vector.broadcast %cst_24 : f32 to vector<8x128xf32>
    %76 = arith.maximumf %72, %75 : vector<8x128xf32>
    %cst_25 = arith.constant dense<0.000000e+00> : vector<128xf32>
    %77 = vector.multi_reduction <add>, %76, %cst_25 [0] : vector<8x128xf32> to vector<128xf32>
    %78 = vector.shape_cast %77 : vector<128xf32> to vector<1x128xf32>
    %cst_26 = arith.constant 8.000000e+00 : f32
    %79 = vector.broadcast %cst_26 : f32 to vector<1x128xf32>
    %80 = arith.divf %78, %79 : vector<1x128xf32>
    %81 = arith.mulf %76, %76 : vector<8x128xf32>
    %cst_27 = arith.constant dense<0.000000e+00> : vector<128xf32>
    %82 = vector.multi_reduction <add>, %81, %cst_27 [0] : vector<8x128xf32> to vector<128xf32>
    %83 = vector.shape_cast %82 : vector<128xf32> to vector<1x128xf32>
    %cst_28 = arith.constant 8.000000e+00 : f32
    %84 = vector.broadcast %cst_28 : f32 to vector<1x128xf32>
    %85 = arith.divf %83, %84 : vector<1x128xf32>
    %86 = arith.mulf %80, %80 : vector<1x128xf32>
    %87 = arith.subf %85, %86 : vector<1x128xf32>
    %cst_29 = arith.constant 9.99999974E-6 : f32
    %88 = vector.broadcast %cst_29 : f32 to vector<1x128xf32>
    %89 = arith.addf %87, %88 : vector<1x128xf32>
    %90 = math.rsqrt %89 : vector<1x128xf32>
    %91 = arith.mulf %90, %73 : vector<1x128xf32>
    %92 = arith.mulf %80, %91 : vector<1x128xf32>
    %93 = arith.subf %74, %92 : vector<1x128xf32>
    %94 = vector.broadcast %91 : vector<1x128xf32> to vector<8x128xf32>
    %95 = arith.mulf %76, %94 : vector<8x128xf32>
    %96 = vector.broadcast %93 : vector<1x128xf32> to vector<8x128xf32>
    %97 = arith.addf %95, %96 : vector<8x128xf32>
    %98 = arith.truncf %97 : vector<8x128xf32> to vector<8x128xbf16>
    %c3 = arith.constant 3 : index
    %c0_30 = arith.constant 0 : index
    %c0_31 = arith.constant 0 : index
    %99 = vector.load %arg1[%c3, %c0_30, %c0_31] : memref<4x128x128xbf16, #tpu.memory_space<vmem>>, vector<1x128x128xbf16>
    %100 = vector.shape_cast %99 : vector<1x128x128xbf16> to vector<128x128xbf16>
    %cst_32 = arith.constant dense<0.000000e+00> : vector<8x128xf32>
    %101 = tpu.matmul %98, %100, %cst_32 {dimension_numbers = #tpu.dot_dimension_numbers<[1], [0], [0], [1], [0, 0, 1, 1], [], []>} : vector<8x128xbf16>, vector<128x128xbf16>, vector<8x128xf32> -> vector<8x128xf32>
    %102 = vector.extract_strided_slice %0 {offsets = [9, 0], sizes = [1, 128], strides = [1, 1]} : vector<10x128xf32> to vector<1x128xf32>
    %103 = vector.broadcast %102 : vector<1x128xf32> to vector<8x128xf32>
    %104 = arith.addf %101, %103 : vector<8x128xf32>
    %c0_33 = arith.constant 0 : index
    %c0_34 = arith.constant 0 : index
    %105 = vector.load %arg3[%c0_33, %c0_34] : memref<8x128xf32, #tpu.memory_space<vmem>>, vector<8x128xf32>
    tpu.vector_store %arg3[%c0_33, %c0_34], %104 {strides = array<i32>} : memref<8x128xf32, #tpu.memory_space<vmem>>, vector<8x128xf32>,
    return
  }
}

</mosaic_0001>

<llo_original>
// kernel: tpu_custom_call.1
$region0: #{tpu_custom_call.1}
  #allocation0 [shape = 'u32[]', space=smem, size = 0x4, offset = 0x4, fixed_abs, tag = 'smem constant byte address 0x4 - core index']
  #allocation1 [shape = 'u32[144,128]{1,0:T(1,128)}', space=vmem, size = 0x12000, scoped, tag = 'internal scratch']
  %s0 = inlined_call_operand.hbm [shape: f32[8,128], index: 0, kind: input, shape index: {}]
  %s1 = inlined_call_operand.hbm [shape: bf16[4,128,128], index: 1, kind: input, shape index: {}]
  %s2 = inlined_call_operand.hbm [shape: f32[10,128], index: 2, kind: input, shape index: {}]
  %s3 = inlined_call_operand.hbm [shape: f32[8,128], index: 3, kind: output, shape index: {}]
  %s4 = sld [smem:[#allocation0]]
  $region34: #{tpu_custom_call.1} parent=0
    _
  %s6 = ssub.s32 1, %s4
  %s7 = scalar_select 0, %s6, %s4
  $region1: #{tpu_custom_call.1} parent=0
    #allocation2 [shape = 'u8[4096]{0}', space=vmem, size = 0x1000, scoped, tag = 'input window, operand 0, single buffered']
    #allocation3 [shape = 's32[1]{0}', space=sflag, size = 0x4, scoped, tag = 'scoped memory for tpu_custom_call.1']
    #allocation4 [shape = 's32[1]{0}', space=sflag, size = 0x4, scoped, tag = 'scoped memory for tpu_custom_call.1']
    #allocation5 [shape = 'u8[131072]{0}', space=vmem, size = 0x20000, scoped, tag = 'input window, operand 1, single buffered']
    #allocation6 [shape = 's32[1]{0}', space=sflag, size = 0x4, scoped, tag = 'scoped memory for tpu_custom_call.1']
    #allocation7 [shape = 'u8[8192]{0}', space=vmem, size = 0x2000, scoped, tag = 'input window, operand 2, single buffered']
    #allocation8 [shape = 'u8[4096]{0}', space=vmem, size = 0x1000, scoped, tag = 'output window, operand 0, single buffered']
    %8 = vsyncpa [#allocation3], 0
    %9 = vsyncpa [#allocation6], 0
    %10 = vsyncpa [#allocation4], 0
    // Predicated region
    $region2: #{tpu_custom_call.1} parent=1 // pred_check
      _
    $region3: #{tpu_custom_call.1} parent=1 // pred_check_branch
      %12 = sbr.rel (0) target = $region5
    $region4: #{tpu_custom_call.1} parent=1 // pred_region
      %s14 = ssub.s32 128, 128
      %15 = vsyncadd [#allocation3], %s14
      %s17 = sshll.u32 [#allocation2], 4
      %s18 = int_to_ptr.vmem [resolvable:$true] %s17
      %20 = dma.hbm_to_vmem [thread:$0]  %s0, 128, %s18, [#allocation3]
    $region5: #{tpu_custom_call.1} parent=1 // pred_fallthru
      _
    // Predicated region
    $region6: #{tpu_custom_call.1} parent=1 // pred_check
      _
    $region7: #{tpu_custom_call.1} parent=1 // pred_check_branch
      %22 = sbr.rel (0) target = $region9
    $region8: #{tpu_custom_call.1} parent=1 // pred_region
      %s24 = ssub.s32 4096, 4096
      %25 = vsyncadd [#allocation6], %s24
      %s26 = sshll.u32 [#allocation5], 4
      %s27 = int_to_ptr.vmem [resolvable:$true] %s26
      %32 = dma.hbm_to_vmem [thread:$0]  %s1, 4096, %s27, [#allocation6], 64, 64, 4
    $region9: #{tpu_custom_call.1} parent=1 // pred_fallthru
      _
    // Predicated region
    $region10: #{tpu_custom_call.1} parent=1 // pred_check
      _
    $region11: #{tpu_custom_call.1} parent=1 // pred_check_branch
      %34 = sbr.rel (0) target = $region13
    $region12: #{tpu_custom_call.1} parent=1 // pred_region
      %s36 = ssub.s32 256, 256
      %37 = vsyncadd [#allocation6], %s36
      %s38 = sshll.u32 [#allocation7], 4
      %s39 = int_to_ptr.vmem [resolvable:$true] %s38
      %44 = dma.hbm_to_vmem [thread:$0]  %s2, 256, %s39, [#allocation6], 128, 128, 8
    $region13: #{tpu_custom_call.1} parent=1 // pred_fallthru
      _
    // Predicated region
    $region14: #{tpu_custom_call.1} parent=1 // pred_check
      _
    $region15: #{tpu_custom_call.1} parent=1 // pred_check_branch
      %46 = sbr.rel (0) target = $region17
    $region16: #{tpu_custom_call.1} parent=1 // pred_region
      %47 = dma.done [#allocation3], 128
    $region17: #{tpu_custom_call.1} parent=1 // pred_fallthru
      _
    // Predicated region
    $region18: #{tpu_custom_call.1} parent=1 // pred_check
      _
    $region19: #{tpu_custom_call.1} parent=1 // pred_check_branch
      %49 = sbr.rel (0) target = $region21
    $region20: #{tpu_custom_call.1} parent=1 // pred_region
      %50 = dma.done [#allocation6], 4096
    $region21: #{tpu_custom_call.1} parent=1 // pred_fallthru
      _
    // Predicated region
    $region22: #{tpu_custom_call.1} parent=1 // pred_check
      _
    $region23: #{tpu_custom_call.1} parent=1 // pred_check_branch
      %52 = sbr.rel (0) target = $region25
    $region24: #{tpu_custom_call.1} parent=1 // pred_region
      %53 = dma.done [#allocation6], 256
    $region25: #{tpu_custom_call.1} parent=1 // pred_fallthru
      _
    %v55 = vld [vmem:[#allocation7] sm:$0xff]
    %v56 = vld [vmem:[#allocation7 + $0x8] sm:$0x3]
    %v57 = vld [vmem:[#allocation2] sm:$0xff]
    %v58 = vpack.c.bf16 %v57, %v57
    %v59 = vld [vmem:[#allocation5] sm:$0xf]
    %v60 = vld [vmem:[#allocation5 + $0x4] sm:$0xf]
    %v61 = vld [vmem:[#allocation5 + $0x8] sm:$0xf]
    %v62 = vld [vmem:[#allocation5 + $0xc] sm:$0xf]
    %v63 = vld [vmem:[#allocation5 + $0x10] sm:$0xf]
    %v64 = vld [vmem:[#allocation5 + $0x14] sm:$0xf]
    %v65 = vld [vmem:[#allocation5 + $0x18] sm:$0xf]
    %v66 = vld [vmem:[#allocation5 + $0x1c] sm:$0xf]
    %v67 = vld [vmem:[#allocation5 + $0x20] sm:$0xf]
    %v68 = vld [vmem:[#allocation5 + $0x24] sm:$0xf]
    %v69 = vld [vmem:[#allocation5 + $0x28] sm:$0xf]
    %v70 = vld [vmem:[#allocation5 + $0x2c] sm:$0xf]
    %v71 = vld [vmem:[#allocation5 + $0x30] sm:$0xf]
    %v72 = vld [vmem:[#allocation5 + $0x34] sm:$0xf]
    %v73 = vld [vmem:[#allocation5 + $0x38] sm:$0xf]
    %v74 = vld [vmem:[#allocation5 + $0x3c] sm:$0xf]
    %v75 = vlaneseq
    %v76 = vshrl.u32 %v75, 7
    %v77 = vsub.s32 0, %v76
    %v78 = vrot.slane %v55, %v77
    %v95 = vunpack.c.l.b16 %v59
    %v96 = vunpack.c.l.b16 %v60
    %v97 = vunpack.c.l.b16 %v61
    %v98 = vunpack.c.l.b16 %v62
    %v99 = vunpack.c.l.b16 %v63
    %v100 = vunpack.c.l.b16 %v64
    %v101 = vunpack.c.l.b16 %v65
    %v102 = vunpack.c.l.b16 %v66
    %v103 = vunpack.c.l.b16 %v67
    %v104 = vunpack.c.l.b16 %v68
    %v105 = vunpack.c.l.b16 %v69
    %v106 = vunpack.c.l.b16 %v70
    %v107 = vunpack.c.l.b16 %v71
    %v108 = vunpack.c.l.b16 %v72
    %v109 = vunpack.c.l.b16 %v73
    %v110 = vunpack.c.l.b16 %v74
    %v111 = vpack.c.b16 %v96, %v95
    %v112 = vpack.c.b16 %v98, %v97
    %v113 = vpack.c.b16 %v100, %v99
    %v114 = vpack.c.b16 %v102, %v101
    %v115 = vpack.c.b16 %v104, %v103
    %v116 = vpack.c.b16 %v106, %v105
    %v117 = vpack.c.b16 %v108, %v107
    %v118 = vpack.c.b16 %v110, %v109
    %127 = vmatprep.subr.bf16.mxu0 0
    %128 = vmatpush1.bf16.msra.mxu0 %v111
    %129 = vmatprep.subr.bf16.mxu0 0
    %130 = vmatpush1.bf16.msra.mxu0 %v112
    %131 = vmatprep.subr.bf16.mxu0 0
    %132 = vmatpush1.bf16.msra.mxu0 %v113
    %133 = vmatprep.subr.bf16.mxu0 0
    %134 = vmatpush1.bf16.msra.mxu0 %v114
    %135 = vmatprep.subr.bf16.mxu0 0
    %136 = vmatpush1.bf16.msra.mxu0 %v115
    %137 = vmatprep.subr.bf16.mxu0 0
    %138 = vmatpush1.bf16.msra.mxu0 %v116
    %139 = vmatprep.subr.bf16.mxu0 0
    %140 = vmatpush1.bf16.msra.mxu0 %v117
    %141 = vmatprep.subr.bf16.mxu0 0
    %142 = vmatpush1.bf16.msra.mxu0 %v118
    %143 = vmatprep.subr.bf16.mxu0 0
    %144 = vmatpush1.bf16.msra.mxu0 0
    %145 = vmatprep.subr.bf16.mxu0 0
    %146 = vmatpush1.bf16.msra.mxu0 0
    %147 = vmatprep.subr.bf16.mxu0 0
    %148 = vmatpush1.bf16.msra.mxu0 0
    %149 = vmatprep.subr.bf16.mxu0 0
    %150 = vmatpush1.bf16.msra.mxu0 0
    %151 = vmatprep.subr.bf16.mxu0 0
    %152 = vmatpush1.bf16.msra.mxu0 0
    %153 = vmatprep.subr.bf16.mxu0 0
    %154 = vmatpush1.bf16.msra.mxu0 0
    %155 = vmatprep.subr.bf16.mxu0 0
    %156 = vmatpush1.bf16.msra.mxu0 0
    %157 = vmatprep.subr.bf16.mxu0 0
    %158 = vmatpush1.bf16.msra.mxu0 0
    %159 = vmatprep.mubr.bf16.mxu0 0
    %160 = vmatmul.mubr.bf16.gmra.mrb[0].mxu0 %v58
    %v161 = vpop.f32.mrb[0].mxu0
    %v162 = vadd.f32 %v78, %v161
    %v163 = vpop.f32.mrb[0].mxu0
    %v164 = vpop.f32.mrb[0].mxu0
    %v165 = vpop.f32.mrb[0].mxu0
    %166 = vdwg.mxu0
    %v167 = vmax.f32 %v162, 0.0
    %v168 = vrot.slane %v167, 4
    %v169 = vadd.f32 %v167, %v168
    %v170 = vrot.slane %v169, 2
    %v171 = vadd.f32 %v169, %v170
    %v172 = vrot.slane %v171, 1
    %v173 = vadd.f32 %v171, %v172
    %v174 = vrcp.pop 8.0
    %v175 = vmul.f32 %v173, %v174
    %v176 = vmul.f32 %v167, %v167
    %v177 = vrot.slane %v176, 4
    %v178 = vadd.f32 %v176, %v177
    %v179 = vrot.slane %v178, 2
    %v180 = vadd.f32 %v178, %v179
    %v181 = vrot.slane %v180, 1
    %v182 = vadd.f32 %v180, %v181
    %v183 = vmul.f32 %v182, %v174
    %v184 = vmul.f32 %v175, %v175
    %v185 = vsub.f32 %v183, %v184
    %v186 = vadd.f32 %v185, 1e-05
    %v187 = vrsqrt.pop %v186
    %v188 = vmul.f32 %v187, %v55
    %v189 = vmul.f32 %v175, %v188
    %v191 = vrot.slane %v189, 7
    %v193 = vsub.f32 %v55, %v191
    %v194 = vlaneseq
    %v195 = vshrl.u32 %v194, 7
    %v196 = vsub.s32 1, %v195
    %v197 = vrot.slane %v188, %v196
    %v198 = vmul.f32 %v167, %v197
    %v199 = vlaneseq
    %v200 = vshrl.u32 %v199, 7
    %v201 = vsub.s32 2, %v200
    %v202 = vrot.slane %v193, %v201
    %v203 = vadd.f32 %v198, %v202
    %v204 = vpack.c.bf16 %v203, %v203
    %s205 = scalar_lea.vmem [#allocation5], 64
    %v206 = vld [vmem:[%s205] sm:$0xf]
    %v207 = vld [vmem:[%s205 + $0x4] sm:$0xf]
    %v208 = vld [vmem:[%s205 + $0x8] sm:$0xf]
    %v209 = vld [vmem:[%s205 + $0xc] sm:$0xf]
    %v210 = vld [vmem:[%s205 + $0x10] sm:$0xf]
    %v211 = vld [vmem:[%s205 + $0x14] sm:$0xf]
    %v212 = vld [vmem:[%s205 + $0x18] sm:$0xf]
    %v213 = vld [vmem:[%s205 + $0x1c] sm:$0xf]
    %v214 = vld [vmem:[%s205 + $0x20] sm:$0xf]
    %v215 = vld [vmem:[%s205 + $0x24] sm:$0xf]
    %v216 = vld [vmem:[%s205 + $0x28] sm:$0xf]
    %v217 = vld [vmem:[%s205 + $0x2c] sm:$0xf]
    %v218 = vld [vmem:[%s205 + $0x30] sm:$0xf]
    %v219 = vld [vmem:[%s205 + $0x34] sm:$0xf]
    %v220 = vld [vmem:[%s205 + $0x38] sm:$0xf]
    %v221 = vld [vmem:[%s205 + $0x3c] sm:$0xf]
    %v222 = vlaneseq
    %v223 = vshrl.u32 %v222, 7
    %v224 = vsub.s32 3, %v223
    %v225 = vrot.slane %v55, %v224
    %v242 = vunpack.c.l.b16 %v206
    %v243 = vunpack.c.l.b16 %v207
    %v244 = vunpack.c.l.b16 %v208
    %v245 = vunpack.c.l.b16 %v209
    %v246 = vunpack.c.l.b16 %v210
    %v247 = vunpack.c.l.b16 %v211
    %v248 = vunpack.c.l.b16 %v212
    %v249 = vunpack.c.l.b16 %v213
    %v250 = vunpack.c.l.b16 %v214
    %v251 = vunpack.c.l.b16 %v215
    %v252 = vunpack.c.l.b16 %v216
    %v253 = vunpack.c.l.b16 %v217
    %v254 = vunpack.c.l.b16 %v218
    %v255 = vunpack.c.l.b16 %v219
    %v256 = vunpack.c.l.b16 %v220
    %v257 = vunpack.c.l.b16 %v221
    %v258 = vpack.c.b16 %v243, %v242
    %v259 = vpack.c.b16 %v245, %v244
    %v260 = vpack.c.b16 %v247, %v246
    %v261 = vpack.c.b16 %v249, %v248
    %v262 = vpack.c.b16 %v251, %v250
    %v263 = vpack.c.b16 %v253, %v252
    %v264 = vpack.c.b16 %v255, %v254
    %v265 = vpack.c.b16 %v257, %v256
    %274 = vmatprep.subr.bf16.mxu0 0
    %275 = vmatpush1.bf16.msra.mxu0 %v258
    %276 = vmatprep.subr.bf16.mxu0 0
    %277 = vmatpush1.bf16.msra.mxu0 %v259
    %278 = vmatprep.subr.bf16.mxu0 0
    %279 = vmatpush1.bf16.msra.mxu0 %v260
    %280 = vmatprep.subr.bf16.mxu0 0
    %281 = vmatpush1.bf16.msra.mxu0 %v261
    %282 = vmatprep.subr.bf16.mxu0 0
    %283 = vmatpush1.bf16.msra.mxu0 %v262
    %284 = vmatprep.subr.bf16.mxu0 0
    %285 = vmatpush1.bf16.msra.mxu0 %v263
    %286 = vmatprep.subr.bf16.mxu0 0
    %287 = vmatpush1.bf16.msra.mxu0 %v264
    %288 = vmatprep.subr.bf16.mxu0 0
    %289 = vmatpush1.bf16.msra.mxu0 %v265
    %290 = vmatprep.subr.bf16.mxu0 0
    %291 = vmatpush1.bf16.msra.mxu0 0
    %292 = vmatprep.subr.bf16.mxu0 0
    %293 = vmatpush1.bf16.msra.mxu0 0
    %294 = vmatprep.subr.bf16.mxu0 0
    %295 = vmatpush1.bf16.msra.mxu0 0
    %296 = vmatprep.subr.bf16.mxu0 0
    %297 = vmatpush1.bf16.msra.mxu0 0
    %298 = vmatprep.subr.bf16.mxu0 0
    %299 = vmatpush1.bf16.msra.mxu0 0
    %300 = vmatprep.subr.bf16.mxu0 0
    %301 = vmatpush1.bf16.msra.mxu0 0
    %302 = vmatprep.subr.bf16.mxu0 0
    %303 = vmatpush1.bf16.msra.mxu0 0
    %304 = vmatprep.subr.bf16.mxu0 0
    %305 = vmatpush1.bf16.msra.mxu0 0
    %306 = vmatprep.mubr.bf16.mxu0 0
    %307 = vmatmul.mubr.bf16.gmra.mrb[0].mxu0 %v204
    %v308 = vpop.f32.mrb[0].mxu0
    %v309 = vadd.f32 %v225, %v308
    %v310 = vpop.f32.mrb[0].mxu0
    %v311 = vpop.f32.mrb[0].mxu0
    %v312 = vpop.f32.mrb[0].mxu0
    %313 = vdwg.mxu0
    %v314 = vmax.f32 %v309, 0.0
    %v315 = vrot.slane %v314, 4
    %v316 = vadd.f32 %v314, %v315
    %v317 = vrot.slane %v316, 2
    %v318 = vadd.f32 %v316, %v317
    %v319 = vrot.slane %v318, 1
    %v320 = vadd.f32 %v318, %v319
    %v321 = vmul.f32 %v320, %v174
    %v322 = vmul.f32 %v314, %v314
    %v323 = vrot.slane %v322, 4
    %v324 = vadd.f32 %v322, %v323
    %v325 = vrot.slane %v324, 2
    %v326 = vadd.f32 %v324, %v325
    %v327 = vrot.slane %v326, 1
    %v328 = vadd.f32 %v326, %v327
    %v329 = vmul.f32 %v328, %v174
    %v330 = vmul.f32 %v321, %v321
    %v331 = vsub.f32 %v329, %v330
    %v332 = vadd.f32 %v331, 1e-05
    %v333 = vrsqrt.pop %v332
    %v334 = vmul.f32 %v333, %v55
    %v335 = vmul.f32 %v321, %v334
    %v337 = vrot.slane %v335, 7
    %v339 = vsub.f32 %v55, %v337
    %v340 = vlaneseq
    %v341 = vshrl.u32 %v340, 7
    %v342 = vsub.s32 4, %v341
    %v343 = vrot.slane %v334, %v342
    %v344 = vmul.f32 %v314, %v343
    %v345 = vlaneseq
    %v346 = vshrl.u32 %v345, 7
    %v347 = vsub.s32 5, %v346
    %v348 = vrot.slane %v339, %v347
    %v349 = vadd.f32 %v344, %v348
    %v350 = vpack.c.bf16 %v349, %v349
    %s351 = scalar_lea.vmem [#allocation5], 128
    %v352 = vld [vmem:[%s351] sm:$0xf]
    %v353 = vld [vmem:[%s351 + $0x4] sm:$0xf]
    %v354 = vld [vmem:[%s351 + $0x8] sm:$0xf]
    %v355 = vld [vmem:[%s351 + $0xc] sm:$0xf]
    %v356 = vld [vmem:[%s351 + $0x10] sm:$0xf]
    %v357 = vld [vmem:[%s351 + $0x14] sm:$0xf]
    %v358 = vld [vmem:[%s351 + $0x18] sm:$0xf]
    %v359 = vld [vmem:[%s351 + $0x1c] sm:$0xf]
    %v360 = vld [vmem:[%s351 + $0x20] sm:$0xf]
    %v361 = vld [vmem:[%s351 + $0x24] sm:$0xf]
    %v362 = vld [vmem:[%s351 + $0x28] sm:$0xf]
    %v363 = vld [vmem:[%s351 + $0x2c] sm:$0xf]
    %v364 = vld [vmem:[%s351 + $0x30] sm:$0xf]
    %v365 = vld [vmem:[%s351 + $0x34] sm:$0xf]
    %v366 = vld [vmem:[%s351 + $0x38] sm:$0xf]
    %v367 = vld [vmem:[%s351 + $0x3c] sm:$0xf]
    %v368 = vlaneseq
    %v369 = vshrl.u32 %v368, 7
    %v370 = vsub.s32 6, %v369
    %v371 = vrot.slane %v55, %v370
    %v388 = vunpack.c.l.b16 %v352
    %v389 = vunpack.c.l.b16 %v353
    %v390 = vunpack.c.l.b16 %v354
    %v391 = vunpack.c.l.b16 %v355
    %v392 = vunpack.c.l.b16 %v356
    %v393 = vunpack.c.l.b16 %v357
    %v394 = vunpack.c.l.b16 %v358
    %v395 = vunpack.c.l.b16 %v359
    %v396 = vunpack.c.l.b16 %v360
    %v397 = vunpack.c.l.b16 %v361
    %v398 = vunpack.c.l.b16 %v362
    %v399 = vunpack.c.l.b16 %v363
    %v400 = vunpack.c.l.b16 %v364
    %v401 = vunpack.c.l.b16 %v365
    %v402 = vunpack.c.l.b16 %v366
    %v403 = vunpack.c.l.b16 %v367
    %v404 = vpack.c.b16 %v389, %v388
    %v405 = vpack.c.b16 %v391, %v390
    %v406 = vpack.c.b16 %v393, %v392
    %v407 = vpack.c.b16 %v395, %v394
    %v408 = vpack.c.b16 %v397, %v396
    %v409 = vpack.c.b16 %v399, %v398
    %v410 = vpack.c.b16 %v401, %v400
    %v411 = vpack.c.b16 %v403, %v402
    %420 = vmatprep.subr.bf16.mxu0 0
    %421 = vmatpush1.bf16.msra.mxu0 %v404
    %422 = vmatprep.subr.bf16.mxu0 0
    %423 = vmatpush1.bf16.msra.mxu0 %v405
    %424 = vmatprep.subr.bf16.mxu0 0
    %425 = vmatpush1.bf16.msra.mxu0 %v406
    %426 = vmatprep.subr.bf16.mxu0 0
    %427 = vmatpush1.bf16.msra.mxu0 %v407
    %428 = vmatprep.subr.bf16.mxu0 0
    %429 = vmatpush1.bf16.msra.mxu0 %v408
    %430 = vmatprep.subr.bf16.mxu0 0
    %431 = vmatpush1.bf16.msra.mxu0 %v409
    %432 = vmatprep.subr.bf16.mxu0 0
    %433 = vmatpush1.bf16.msra.mxu0 %v410
    %434 = vmatprep.subr.bf16.mxu0 0
    %435 = vmatpush1.bf16.msra.mxu0 %v411
    %436 = vmatprep.subr.bf16.mxu0 0
    %437 = vmatpush1.bf16.msra.mxu0 0
    %438 = vmatprep.subr.bf16.mxu0 0
    %439 = vmatpush1.bf16.msra.mxu0 0
    %440 = vmatprep.subr.bf16.mxu0 0
    %441 = vmatpush1.bf16.msra.mxu0 0
    %442 = vmatprep.subr.bf16.mxu0 0
    %443 = vmatpush1.bf16.msra.mxu0 0
    %444 = vmatprep.subr.bf16.mxu0 0
    %445 = vmatpush1.bf16.msra.mxu0 0
    %446 = vmatprep.subr.bf16.mxu0 0
    %447 = vmatpush1.bf16.msra.mxu0 0
    %448 = vmatprep.subr.bf16.mxu0 0
    %449 = vmatpush1.bf16.msra.mxu0 0
    %450 = vmatprep.subr.bf16.mxu0 0
    %451 = vmatpush1.bf16.msra.mxu0 0
    %452 = vmatprep.mubr.bf16.mxu0 0
    %453 = vmatmul.mubr.bf16.gmra.mrb[0].mxu0 %v350
    %v454 = vpop.f32.mrb[0].mxu0
    %v455 = vadd.f32 %v371, %v454
    %v456 = vpop.f32.mrb[0].mxu0
    %v457 = vpop.f32.mrb[0].mxu0
    %v458 = vpop.f32.mrb[0].mxu0
    %459 = vdwg.mxu0
    %v460 = vmax.f32 %v455, 0.0
    %v461 = vrot.slane %v460, 4
    %v462 = vadd.f32 %v460, %v461
    %v463 = vrot.slane %v462, 2
    %v464 = vadd.f32 %v462, %v463
    %v465 = vrot.slane %v464, 1
    %v466 = vadd.f32 %v464, %v465
    %v467 = vmul.f32 %v466, %v174
    %v468 = vmul.f32 %v460, %v460
    %v469 = vrot.slane %v468, 4
    %v470 = vadd.f32 %v468, %v469
    %v471 = vrot.slane %v470, 2
    %v472 = vadd.f32 %v470, %v471
    %v473 = vrot.slane %v472, 1
    %v474 = vadd.f32 %v472, %v473
    %v475 = vmul.f32 %v474, %v174
    %v476 = vmul.f32 %v467, %v467
    %v477 = vsub.f32 %v475, %v476
    %v478 = vadd.f32 %v477, 1e-05
    %v479 = vrsqrt.pop %v478
    %v480 = vmul.f32 %v479, %v55
    %v481 = vmul.f32 %v467, %v480
    %v483 = vrot.slane %v481, 7
    %v485 = vsub.f32 %v56, %v483
    %v486 = vlaneseq
    %v487 = vshrl.u32 %v486, 7
    %v488 = vsub.s32 7, %v487
    %v489 = vrot.slane %v480, %v488
    %v490 = vmul.f32 %v460, %v489
    %v491 = vlaneseq
    %v492 = vshrl.u32 %v491, 7
    %v493 = vsub.s32 0, %v492
    %v494 = vrot.slane %v485, %v493
    %v495 = vadd.f32 %v490, %v494
    %v496 = vpack.c.bf16 %v495, %v495
    %s497 = scalar_lea.vmem [#allocation5], 192
    %v498 = vld [vmem:[%s497] sm:$0xf]
    %v499 = vld [vmem:[%s497 + $0x4] sm:$0xf]
    %v500 = vld [vmem:[%s497 + $0x8] sm:$0xf]
    %v501 = vld [vmem:[%s497 + $0xc] sm:$0xf]
    %v502 = vld [vmem:[%s497 + $0x10] sm:$0xf]
    %v503 = vld [vmem:[%s497 + $0x14] sm:$0xf]
    %v504 = vld [vmem:[%s497 + $0x18] sm:$0xf]
    %v505 = vld [vmem:[%s497 + $0x1c] sm:$0xf]
    %v506 = vld [vmem:[%s497 + $0x20] sm:$0xf]
    %v507 = vld [vmem:[%s497 + $0x24] sm:$0xf]
    %v508 = vld [vmem:[%s497 + $0x28] sm:$0xf]
    %v509 = vld [vmem:[%s497 + $0x2c] sm:$0xf]
    %v510 = vld [vmem:[%s497 + $0x30] sm:$0xf]
    %v511 = vld [vmem:[%s497 + $0x34] sm:$0xf]
    %v512 = vld [vmem:[%s497 + $0x38] sm:$0xf]
    %v513 = vld [vmem:[%s497 + $0x3c] sm:$0xf]
    %v514 = vlaneseq
    %v515 = vshrl.u32 %v514, 7
    %v516 = vsub.s32 1, %v515
    %v517 = vrot.slane %v56, %v516
    %v534 = vunpack.c.l.b16 %v498
    %v535 = vunpack.c.l.b16 %v499
    %v536 = vunpack.c.l.b16 %v500
    %v537 = vunpack.c.l.b16 %v501
    %v538 = vunpack.c.l.b16 %v502
    %v539 = vunpack.c.l.b16 %v503
    %v540 = vunpack.c.l.b16 %v504
    %v541 = vunpack.c.l.b16 %v505
    %v542 = vunpack.c.l.b16 %v506
    %v543 = vunpack.c.l.b16 %v507
    %v544 = vunpack.c.l.b16 %v508
    %v545 = vunpack.c.l.b16 %v509
    %v546 = vunpack.c.l.b16 %v510
    %v547 = vunpack.c.l.b16 %v511
    %v548 = vunpack.c.l.b16 %v512
    %v549 = vunpack.c.l.b16 %v513
    %v550 = vpack.c.b16 %v535, %v534
    %v551 = vpack.c.b16 %v537, %v536
    %v552 = vpack.c.b16 %v539, %v538
    %v553 = vpack.c.b16 %v541, %v540
    %v554 = vpack.c.b16 %v543, %v542
    %v555 = vpack.c.b16 %v545, %v544
    %v556 = vpack.c.b16 %v547, %v546
    %v557 = vpack.c.b16 %v549, %v548
    %566 = vmatprep.subr.bf16.mxu0 0
    %567 = vmatpush1.bf16.msra.mxu0 %v550
    %568 = vmatprep.subr.bf16.mxu0 0
    %569 = vmatpush1.bf16.msra.mxu0 %v551
    %570 = vmatprep.subr.bf16.mxu0 0
    %571 = vmatpush1.bf16.msra.mxu0 %v552
    %572 = vmatprep.subr.bf16.mxu0 0
    %573 = vmatpush1.bf16.msra.mxu0 %v553
    %574 = vmatprep.subr.bf16.mxu0 0
    %575 = vmatpush1.bf16.msra.mxu0 %v554
    %576 = vmatprep.subr.bf16.mxu0 0
    %577 = vmatpush1.bf16.msra.mxu0 %v555
    %578 = vmatprep.subr.bf16.mxu0 0
    %579 = vmatpush1.bf16.msra.mxu0 %v556
    %580 = vmatprep.subr.bf16.mxu0 0
    %581 = vmatpush1.bf16.msra.mxu0 %v557
    %582 = vmatprep.subr.bf16.mxu0 0
    %583 = vmatpush1.bf16.msra.mxu0 0
    %584 = vmatprep.subr.bf16.mxu0 0
    %585 = vmatpush1.bf16.msra.mxu0 0
    %586 = vmatprep.subr.bf16.mxu0 0
    %587 = vmatpush1.bf16.msra.mxu0 0
    %588 = vmatprep.subr.bf16.mxu0 0
    %589 = vmatpush1.bf16.msra.mxu0 0
    %590 = vmatprep.subr.bf16.mxu0 0
    %591 = vmatpush1.bf16.msra.mxu0 0
    %592 = vmatprep.subr.bf16.mxu0 0
    %593 = vmatpush1.bf16.msra.mxu0 0
    %594 = vmatprep.subr.bf16.mxu0 0
    %595 = vmatpush1.bf16.msra.mxu0 0
    %596 = vmatprep.subr.bf16.mxu0 0
    %597 = vmatpush1.bf16.msra.mxu0 0
    %598 = vmatprep.mubr.bf16.mxu0 0
    %599 = vmatmul.mubr.bf16.gmra.mrb[0].mxu0 %v496
    %v600 = vpop.f32.mrb[0].mxu0
    %v601 = vadd.f32 %v517, %v600
    %v602 = vpop.f32.mrb[0].mxu0
    %v603 = vpop.f32.mrb[0].mxu0
    %v604 = vpop.f32.mrb[0].mxu0
    %605 = vdwg.mxu0
    %606 = vst [vmem:[#allocation8] sm:$0xff] %v601
    // Predicated region
    $region26: #{tpu_custom_call.1} parent=1 // pred_check
      _
    $region27: #{tpu_custom_call.1} parent=1 // pred_check_branch
      %608 = sbr.rel (0) target = $region29
    $region28: #{tpu_custom_call.1} parent=1 // pred_region
      %s610 = ssub.s32 128, 128
      %611 = vsyncadd [#allocation4], %s610
      %s613 = sshll.u32 [#allocation8], 4
      %s614 = int_to_ptr.vmem [resolvable:$true] %s613
      %616 = dma.vmem_to_hbm [thread:$0]  %s614, 128, %s3, [#allocation4]
    $region29: #{tpu_custom_call.1} parent=1 // pred_fallthru
      _
    // Predicated region
    $region30: #{tpu_custom_call.1} parent=1 // pred_check
      _
    $region31: #{tpu_custom_call.1} parent=1 // pred_check_branch
      %618 = sbr.rel (0) target = $region33
    $region32: #{tpu_custom_call.1} parent=1 // pred_region
      %619 = dma.done [#allocation4], 128
    $region33: #{tpu_custom_call.1} parent=1 // pred_fallthru
      _
    %620 = vsyncpa [#allocation3], 1
    %621 = vsyncpa [#allocation6], 1
    %622 = vsyncpa [#allocation4], 1

</llo_original>
